<compile_context>
chip_gen: v7x
topology: tpu7x:2x2x1
jax: 0.10.0
libtpu: 0.0.40
codegen_flags: <defaults>
</compile_context>

<pallas_src>
import jax
import jax.numpy as jnp
from jax.experimental import pallas as pl
from jax.experimental.pallas import tpu as pltpu

_LANE = 512          # lane-dense last dim (multiple of 128)
_BLOCK_ROWS = 256    # rows per tile -> (256, 512) f32 = 512 KiB per buffer


# ----------------------------------------------------------------------------
# Pallas kernel: grad_in = (-coeff) * grad_out
# ----------------------------------------------------------------------------
def _neg_scale_kernel(neg_coeff_ref, g_ref, o_ref):
    # neg_coeff lives in SMEM as f32; multiply promotes, then cast to out dtype.
    o_ref[...] = (g_ref[...] * neg_coeff_ref[0]).astype(o_ref.dtype)


def _neg_scale_pallas(coeff, g):
    """Compute -coeff * g with a tiled, lane-dense Pallas kernel."""
    orig_shape = g.shape
    orig_dtype = g.dtype

    n = g.size
    flat = g.reshape((-1,))
    pad = (-n) % _LANE
    if pad:
        flat = jnp.pad(flat, (0, pad))
    rows = flat.size // _LANE
    g2d = flat.reshape((rows, _LANE))

    block_rows = _BLOCK_ROWS if rows >= _BLOCK_ROWS else rows
    grid = (pl.cdiv(rows, block_rows),)

    # Keep the scalar in f32 regardless of grad dtype; fold the negation once.
    neg_coeff = (-jnp.asarray(coeff, jnp.float32)).reshape((1,))

    out2d = pl.pallas_call(
        _neg_scale_kernel,
        out_shape=jax.ShapeDtypeStruct(g2d.shape, g2d.dtype),
        grid_spec=pltpu.PrefetchScalarGridSpec(
            num_scalar_prefetch=0,
            grid=grid,
            in_specs=[
                pl.BlockSpec(memory_space=pltpu.SMEM),            # -coeff scalar
                pl.BlockSpec((block_rows, _LANE), lambda i: (i, 0)),
            ],
            out_specs=pl.BlockSpec((block_rows, _LANE), lambda i: (i, 0)),
        ),
        input_output_aliases={1: 0},  # donate grad buffer (g2d -> output)
        compiler_params=pltpu.CompilerParams(
            dimension_semantics=("parallel",)),
    )(neg_coeff, g2d)

    flat_out = out2d.reshape((-1,))
    if pad:
        flat_out = flat_out[:n]
    return flat_out.reshape(orig_shape).astype(orig_dtype)


# ----------------------------------------------------------------------------
# GradientReverseLayer: fwd identity (no kernel), bwd = -coeff * grad (Pallas)
# ----------------------------------------------------------------------------
@jax.custom_vjp
def _gradient_reverse_core(coeff, x):
    return x  # identity forward: zero HBM traffic, fully fusable by XLA


def _grl_fwd(coeff, x):
    return x, coeff


def _grl_bwd(coeff, g):
    return (jnp.zeros_like(coeff), _neg_scale_pallas(coeff, g))


_gradient_reverse_core.defvjp(_grl_fwd, _grl_bwd)


def gradient_reverse(coeff, x):
    """GradientReverseLayer: forward identity, backward -coeff * grad."""
    return _gradient_reverse_core(jnp.asarray(coeff, jnp.float32), x)


# ----------------------------------------------------------------------------
# GradientReverseModule equivalent
# ----------------------------------------------------------------------------
class GradientReverseModule:
    def __init__(self, scheduler):
        self.scheduler = scheduler
        self.global_step = 0.0
        self.coeff = 0.0

    def __call__(self, x):
        self.coeff = self.scheduler(self.global_step)
        self.global_step += 1.0
        # coeff enters as traced data (f32 scalar) -> no per-step recompiles.
        return gradient_reverse(jnp.asarray(self.coeff, jnp.float32), x)


# ----------------------------------------------------------------------------
# Demo / self-test
# ----------------------------------------------------------------------------
if __name__ == "__main__":
    import math

    # Deterministic scheduler (typical DANN-style ramp).
    def scheduler(step):
        return 2.0 / (1.0 + math.exp(-10.0 * step / 100.0)) - 1.0

    key = jax.random.PRNGKey(0)
    x = jax.random.normal(key, (2, 4, 16, 16), dtype=jnp.float32)  # NCHW

    grm = GradientReverseModule(scheduler)

    # Step 0 forward (identity, coeff == 0 for this scheduler).
    y = jax.block_until_ready(grm(x))
    assert y.shape == x.shape and y.dtype == x.dtype
    assert jnp.allclose(y, x)

    # Step 1 forward gives a non-zero coeff for a meaningful backward check.
    y = jax.block_until_ready(grm(x))
    assert jnp.allclose(y, x)
    coeff = jnp.asarray(grm.coeff, jnp.float32)
    assert float(coeff) != 0.0

    # f32 path: d/dx sum(grl(coeff, x)) == -coeff everywhere.
    grad = jax.grad(lambda v: jnp.sum(gradient_reverse(coeff, v)))(x)
    grad = jax.block_until_ready(grad)
    assert jnp.allclose(grad, jnp.full_like(x, -coeff), atol=1e-6)

    # bf16 path: coeff stays f32 in SMEM; only the output is cast.
    xb = x.astype(jnp.bfloat16)
    gradb = jax.grad(lambda v: jnp.sum(gradient_reverse(coeff, v)))(xb)
    gradb = jax.block_until_ready(gradb)
    assert gradb.dtype == jnp.bfloat16
    assert jnp.allclose(gradb.astype(jnp.float32),
                        jnp.full(x.shape, -float(coeff), jnp.float32),
                        atol=1e-2)

    # Odd-size tensor exercises the pad/slice path of the lane-dense reshape.
    x_odd = jax.random.normal(jax.random.PRNGKey(1), (3, 5, 7), jnp.float32)
    grad_odd = jax.grad(lambda v: jnp.sum(gradient_reverse(coeff, v)))(x_odd)
    grad_odd = jax.block_until_ready(grad_odd)
    assert jnp.allclose(grad_odd, jnp.full_like(x_odd, -coeff), atol=1e-6)

    print("KERNEL_OK")
</pallas_src>

<mosaic_0001>
module attributes {stable_mosaic.version = 11 : i64} {
  func.func @_neg_scale_kernel(%arg0: i32, %arg1: memref<1xf32, #tpu.memory_space<smem>>, %arg2: memref<4x512xf32, #tpu.memory_space<vmem>>, %arg3: memref<4x512xf32, #tpu.memory_space<vmem>>) attributes {dimension_semantics = [#tpu.dimension_semantics<parallel>], iteration_bounds = array<i64: 1>, scalar_prefetch = 0 : i64, scratch_operands = 0 : i64, tpu.core_type = #tpu.core_type<tc>, window_params = [{transform_indices = @transform_0, window_bounds = array<i64: 1>}, {transform_indices = @transform_1, window_bounds = array<i64: 4, 512>}, {transform_indices = @transform_2, window_bounds = array<i64: 4, 512>}]} {
    %c0 = arith.constant 0 : index
    %c0_0 = arith.constant 0 : index
    %0 = vector.load %arg2[%c0, %c0_0] : memref<4x512xf32, #tpu.memory_space<vmem>>, vector<4x512xf32>
    %c0_1 = arith.constant 0 : index
    %1 = memref.load %arg1[%c0_1] : memref<1xf32, #tpu.memory_space<smem>>
    %2 = vector.broadcast %1 : f32 to vector<4x512xf32>
    %3 = arith.mulf %0, %2 : vector<4x512xf32>
    %c0_2 = arith.constant 0 : index
    %c0_3 = arith.constant 0 : index
    %4 = vector.load %arg3[%c0_2, %c0_3] : memref<4x512xf32, #tpu.memory_space<vmem>>, vector<4x512xf32>
    tpu.vector_store %arg3[%c0_2, %c0_3], %3 {strides = array<i32>} : memref<4x512xf32, #tpu.memory_space<vmem>>, vector<4x512xf32>,
    return
  }
  func.func @transform_0(%arg0: i32) -> i32 {
    %c0_i32 = arith.constant 0 : i32
    %c0_i32_0 = arith.constant 0 : i32
    return %c0_i32 : i32
  }
  func.func @transform_1(%arg0: i32) -> (i32, i32) {
    %c0_i32 = arith.constant 0 : i32
    %c0_i32_0 = arith.constant 0 : i32
    return %arg0, %c0_i32 : i32, i32
  }
  func.func @transform_2(%arg0: i32) -> (i32, i32) {
    %c0_i32 = arith.constant 0 : i32
    %c0_i32_0 = arith.constant 0 : i32
    return %arg0, %c0_i32 : i32, i32
  }
}

</mosaic_0001>

<llo_original>
// kernel: tpu_custom_call.1
$region0: #{tpu_custom_call.1}
  #allocation0 [shape = 'u32[]', space=smem, size = 0x4, offset = 0x4, fixed_abs, tag = 'smem constant byte address 0x4 - core index']
  #allocation1 [shape = 'u32[144,128]{1,0:T(1,128)}', space=vmem, size = 0x12000, scoped, tag = 'internal scratch']
  #allocation2 [shape = 'f32[1]{0:T(128)S(6)}', space=smem, size = 0x200, scoped, tag = 'scoped memory for tpu_custom_call.1']
  %s0 = inlined_call_operand.<no memory space> [shape: f32[1], index: 0, kind: input, shape index: {}]
  %s1 = inlined_call_operand.hbm [shape: f32[4,512], index: 1, kind: input, shape index: {}, may-alias: {1,2}]
  %s2 = inlined_call_operand.hbm [shape: f32[4,512], index: 2, kind: output, shape index: {}, may-alias: {1,2}]
  %s3 = sld [smem:[#allocation0]]
  $region22: #{tpu_custom_call.1} parent=0
    _
  %s5 = ssub.s32 1, %s3
  %s6 = scalar_select 0, %s5, %s3
  %7 = sst [smem:[#allocation2]] %s0
  $region1: #{tpu_custom_call.1} parent=0
    #allocation3 [shape = 'u8[8192]{0}', space=vmem, size = 0x2000, scoped, tag = 'input window, operand 1, single buffered']
    #allocation4 [shape = 's32[1]{0}', space=sflag, size = 0x4, scoped, tag = 'scoped memory for tpu_custom_call.1']
    #allocation5 [shape = 's32[1]{0}', space=sflag, size = 0x4, scoped, tag = 'scoped memory for tpu_custom_call.1']
    #allocation6 [shape = 'u8[8192]{0}', space=vmem, size = 0x2000, scoped, tag = 'output window, operand 0, single buffered']
    %8 = vsyncpa [#allocation4], 0
    %9 = vsyncpa [#allocation5], 0
    // Predicated region
    $region2: #{tpu_custom_call.1} parent=1 // pred_check
      _
    $region3: #{tpu_custom_call.1} parent=1 // pred_check_branch
      %11 = sbr.rel (0) target = $region5
    $region4: #{tpu_custom_call.1} parent=1 // pred_region
      _
    $region5: #{tpu_custom_call.1} parent=1 // pred_fallthru
      _
    // Predicated region
    $region6: #{tpu_custom_call.1} parent=1 // pred_check
      _
    $region7: #{tpu_custom_call.1} parent=1 // pred_check_branch
      %13 = sbr.rel (0) target = $region9
    $region8: #{tpu_custom_call.1} parent=1 // pred_region
      %s15 = ssub.s32 256, 256
      %16 = vsyncadd [#allocation4], %s15
      %s18 = sshll.u32 [#allocation3], 4
      %s19 = int_to_ptr.vmem [resolvable:$true] %s18
      %21 = dma.hbm_to_vmem [thread:$0]  %s1, 256, %s19, [#allocation4]
    $region9: #{tpu_custom_call.1} parent=1 // pred_fallthru
      _
    // Predicated region
    $region10: #{tpu_custom_call.1} parent=1 // pred_check
      _
    $region11: #{tpu_custom_call.1} parent=1 // pred_check_branch
      %23 = sbr.rel (0) target = $region13
    $region12: #{tpu_custom_call.1} parent=1 // pred_region
      %24 = dma.done [#allocation4], 256
    $region13: #{tpu_custom_call.1} parent=1 // pred_fallthru
      _
    %v25 = vld [vmem:[#allocation3] sm:$0xff]
    %v26 = vld [vmem:[#allocation3 + $0x8] sm:$0xff]
    %s27 = sld [smem:[#allocation2]]
    %v28 = vstv %s27
    %v29 = vmul.f32 %v25, %v28
    %v30 = vmul.f32 %v26, %v28
    %31 = vst [vmem:[#allocation6] sm:$0xff] %v29
    %32 = vst [vmem:[#allocation6 + $0x8] sm:$0xff] %v30
    // Predicated region
    $region14: #{tpu_custom_call.1} parent=1 // pred_check
      _
    $region15: #{tpu_custom_call.1} parent=1 // pred_check_branch
      %34 = sbr.rel (0) target = $region17
    $region16: #{tpu_custom_call.1} parent=1 // pred_region
      %s36 = ssub.s32 256, 256
      %37 = vsyncadd [#allocation5], %s36
      %s39 = sshll.u32 [#allocation6], 4
      %s40 = int_to_ptr.vmem [resolvable:$true] %s39
      %42 = dma.vmem_to_hbm [thread:$0]  %s40, 256, %s2, [#allocation5]
    $region17: #{tpu_custom_call.1} parent=1 // pred_fallthru
      _
    // Predicated region
    $region18: #{tpu_custom_call.1} parent=1 // pred_check
      _
    $region19: #{tpu_custom_call.1} parent=1 // pred_check_branch
      %44 = sbr.rel (0) target = $region21
    $region20: #{tpu_custom_call.1} parent=1 // pred_region
      %45 = dma.done [#allocation5], 256
    $region21: #{tpu_custom_call.1} parent=1 // pred_fallthru
      _
    %46 = vsyncpa [#allocation4], 1
    %47 = vsyncpa [#allocation5], 1

</llo_original>
